<compile_context>
chip_gen: v7x
topology: tpu7x:2x2x1
jax: 0.10.0
libtpu: 0.0.40
codegen_flags: <defaults>
</compile_context>

<pallas_src>
import functools
import math

import jax
import jax.numpy as jnp
from jax import lax
from jax.experimental import pallas as pl
from jax.experimental.pallas import tpu as pltpu

_LANE = 128  # TPU lane width.


def _round_up(x, m):
    return ((x + m - 1) // m) * m


def _conloss_kernel(q_ref, tanc_ref, tcon_ref, out_ref,
                    m_ref, l_ref, psum_ref, den_ref, onehot_ref,
                    *, tq, tk, cpad, scale):
    """One (qi, ki) tile of the supervised-contrastive loss.

    Layout (transposed on purpose):
      anchors  i -> LANES    (tq wide)   : per-anchor stats are [1, tq]
      contrast j -> SUBLANES (tk tall)

    q_ref:    [tk, Cpad] f32   Q[j, c] = <contrast_j, proto_c> / T
    tanc_ref: [1, tq]    i32   anchor targets   (-1 for padded anchors)
    tcon_ref: [tk, 1]    i32   contrast targets (-1 for padded samples)
    out_ref:  [1, tq]    f32   per-anchor loss contribution (already scaled)
    scratch:  m, l, psum, den [1, tq] f32 ; onehot [Cpad, tq] f32
    """
    qi = pl.program_id(0)               # anchor (lane) tile      -- "parallel"
    ki = pl.program_id(1)               # contrast (sublane) tile -- "arbitrary"
    q0 = qi * tq
    k0 = ki * tk

    @pl.when(ki == 0)
    def _init():
        m_ref[...] = jnp.full_like(m_ref, -jnp.inf)
        l_ref[...] = jnp.zeros_like(l_ref)
        psum_ref[...] = jnp.zeros_like(psum_ref)
        den_ref[...] = jnp.zeros_like(den_ref)
        # One-hot(anchor targets): built once per row tile, reused across ki.
        cls = lax.broadcasted_iota(jnp.int32, (cpad, tq), 0)
        onehot_ref[...] = (cls == tanc_ref[...]).astype(jnp.float32)

    # s[j, i] = <proto[target_i], contrast_j> / T via the rank-C one-hot expand
    # (tiny MXU matmul with K = Cpad; f32 operands kept — not the bottleneck).
    s = lax.dot_general(q_ref[...], onehot_ref[...],
                        dimension_numbers=(((1,), (0,)), ((), ())),
                        preferred_element_type=jnp.float32)        # [tk, tq]

    tanc = tanc_ref[...]                 # [1, tq]
    tcon = tcon_ref[...]                 # [tk, 1]
    con_valid = tcon >= 0                # [tk, 1]  padded contrast rows carry -1

    def accumulate(excl):
        # excl: bool, broadcastable to [tk, tq]; True where contrast row j
        # participates in anchor i's denominator / positive set.
        pos = jnp.logical_and(tcon == tanc, excl)                       # [tk, tq]
        psum_ref[...] += jnp.sum(jnp.where(pos, s, 0.0), axis=0, keepdims=True)
        den_ref[...] += jnp.sum(pos.astype(jnp.float32), axis=0, keepdims=True)
        # Online (flash-style) log-sum-exp over contrast tiles.
        m_prev = m_ref[...]
        m_new = jnp.maximum(m_prev, jnp.max(s, axis=0, keepdims=True))
        p = jnp.where(excl, jnp.exp(s - m_new), 0.0)
        l_ref[...] = (jnp.exp(m_prev - m_new) * l_ref[...]
                      + jnp.sum(p, axis=0, keepdims=True))
        m_ref[...] = m_new

    # Only tiles straddling the diagonal need the (i != j) self-exclusion iota
    # mask; interior tiles use the thin [tk, 1] validity mask directly.
    straddle = jnp.logical_and(k0 < q0 + tq, q0 < k0 + tk)

    @pl.when(straddle)
    def _diag_tile():
        j_g = k0 + lax.broadcasted_iota(jnp.int32, (tk, tq), 0)
        i_g = q0 + lax.broadcasted_iota(jnp.int32, (tk, tq), 1)
        accumulate(jnp.logical_and(con_valid, j_g != i_g))

    @pl.when(jnp.logical_not(straddle))
    def _interior_tile():
        accumulate(con_valid)

    @pl.when(ki == pl.num_programs(1) - 1)
    def _finalize():
        log_z = m_ref[...] + jnp.log(l_ref[...])
        # Exact division (review: approx reciprocal dropped).  den == 0 (an
        # anchor with no positives) yields NaN, matching the PyTorch original;
        # padded anchors (target -1) are zeroed below.
        mean_log_prob_pos = psum_ref[...] / den_ref[...] - log_z
        out_ref[...] = jnp.where(tanc >= 0, scale * mean_log_prob_pos, 0.0)


def con_loss(features, targets, global_protos,
             temperature=0.07, base_temperature=0.07,
             tq=2 * _LANE, tk=2 * _LANE):
    """Supervised contrastive loss vs. global prototypes (contrast_mode='all').

    features: [B, V, ...] float; targets: [B] int; global_protos: [C, D] float.
    tq/tk: anchor / contrast tile sizes (multiples of 128).  Defaults target
    v6e/v7x (256-wide MXU); on v5e prefer tk=128.
    """
    if features.ndim < 3:
        raise ValueError('`features` needs to be [bsz, n_views, ...], '
                         'at least 3 dimensions are required')
    if features.ndim > 3:
        features = features.reshape(features.shape[0], features.shape[1], -1)
    B, V, D = features.shape
    N = B * V
    C = global_protos.shape[0]

    # --- tile-size selection --------------------------------------------------
    nmin = _round_up(N, _LANE)
    tq = min(tq, nmin)
    tk = min(tk, nmin)
    if nmin >= 2 * _LANE:
        # Keep >= 2 blocks on the "parallel" anchor axis (v7x: 2 TensorCores).
        tq = min(tq, (nmin // 2) // _LANE * _LANE)
    assert tq % _LANE == 0 and tk % _LANE == 0
    Npad = _round_up(N, tq * tk // math.gcd(tq, tk))
    Cpad = _round_up(max(C, 8), 8)

    # --- rank-C precompute (plain XLA; D never enters the Pallas kernel) ------
    # contrast_feature = cat(unbind(features, dim=1), dim=0): view-major [N, D]
    contrast = jnp.transpose(features, (1, 0, 2)).reshape(N, D).astype(jnp.float32)
    targets_rep = jnp.tile(targets.astype(jnp.int32), V)                   # [N]
    protos = global_protos.astype(jnp.float32)
    q = jnp.dot(contrast, protos.T,
                precision=lax.Precision.HIGHEST,
                preferred_element_type=jnp.float32) / temperature          # [N, C]

    q_pad = jnp.zeros((Npad, Cpad), jnp.float32).at[:N, :C].set(q)
    t_pad = jnp.full((Npad,), -1, jnp.int32).at[:N].set(targets_rep)
    t_anchor = t_pad.reshape(1, Npad)      # anchor targets, lane-major
    t_contrast = t_pad.reshape(Npad, 1)    # contrast targets, sublane-major

    # Fold -(T/base_T) and the final 1/N mean into one in-kernel constant.
    scale = -(temperature / base_temperature) / float(N)

    kernel = functools.partial(_conloss_kernel, tq=tq, tk=tk, cpad=Cpad,
                               scale=float(scale))

    grid = (Npad // tq, Npad // tk)
    per_anchor = pl.pallas_call(
        kernel,
        out_shape=jax.ShapeDtypeStruct((1, Npad), jnp.float32),
        grid_spec=pltpu.PrefetchScalarGridSpec(
            num_scalar_prefetch=0,
            grid=grid,
            in_specs=[
                # Q tile: the only per-step HBM stream (Cpad*tk*4 B, tiny, so
                # default double-buffering is plenty; DMA is never exposed).
                pl.BlockSpec((tk, Cpad), lambda qi, ki: (ki, 0)),
                pl.BlockSpec((1, tq), lambda qi, ki: (0, qi)),    # anchor targets
                pl.BlockSpec((tk, 1), lambda qi, ki: (ki, 0)),    # contrast targets
            ],
            out_specs=pl.BlockSpec((1, tq), lambda qi, ki: (0, qi)),
            scratch_shapes=[pltpu.VMEM((1, tq), jnp.float32)] * 4    # m, l, psum, den
                         + [pltpu.VMEM((Cpad, tq), jnp.float32)],    # one-hot(targets)
        ),
        compiler_params=pltpu.CompilerParams(
            dimension_semantics=("parallel", "arbitrary")),
    )(q_pad, t_anchor, t_contrast)

    # Padded anchors contribute exactly 0; trailing reduction is O(Npad).
    return jnp.sum(per_anchor)


def _con_loss_ref(features, targets, global_protos,
                  temperature=0.07, base_temperature=0.07):
    """Pure-JAX reference mirroring the PyTorch forward, for verification."""
    B, V, D = features.shape
    N = B * V
    contrast_feature = jnp.transpose(features, (1, 0, 2)).reshape(N, D)
    targets_rep = jnp.tile(targets, V)
    anchor_feature = global_protos[targets_rep]
    adc = jnp.dot(anchor_feature, contrast_feature.T,
                  precision=lax.Precision.HIGHEST) / temperature
    logits = adc - jnp.max(adc, axis=1, keepdims=True)
    mask = (targets_rep[:, None] == targets_rep[None, :]).astype(jnp.float32)
    logits_mask = 1.0 - jnp.eye(N, dtype=jnp.float32)
    mask = mask * logits_mask
    exp_logits = jnp.exp(logits) * logits_mask
    log_prob = logits - jnp.log(exp_logits.sum(1, keepdims=True))
    mean_log_prob_pos = (mask * log_prob).sum(1) / mask.sum(1)
    loss = -(temperature / base_temperature) * mean_log_prob_pos
    return loss.reshape(V, B).mean()


if __name__ == "__main__":
    key = jax.random.PRNGKey(0)
    B, V, D, C = 8, 2, 32, 4   # batch, n_views, feature dim, num classes

    k1, k2, k3 = jax.random.split(key, 3)
    features = jax.random.normal(k1, (B, V, D), dtype=jnp.float32)
    # L2-normalize per-view features (typical for SupCon inputs)
    features = features / jnp.linalg.norm(features, axis=-1, keepdims=True)
    targets = jax.random.randint(k2, (B,), 0, C, dtype=jnp.int32)
    global_protos = jax.random.normal(k3, (C, D), dtype=jnp.float32)
    global_protos = global_protos / jnp.linalg.norm(
        global_protos, axis=-1, keepdims=True)

    loss = jax.block_until_ready(con_loss(features, targets, global_protos))

    ref = _con_loss_ref(features, targets, global_protos)
    # Everything stays f32 with exact division, so the match is tight.
    assert jnp.allclose(loss, ref, rtol=1e-4, atol=1e-4), (loss, ref)

    print("KERNEL_OK")
</pallas_src>

<mosaic_0001>
module attributes {stable_mosaic.version = 11 : i64} {
  func.func @_conloss_kernel(%arg0: i32, %arg1: i32, %arg2: memref<128x8xf32, #tpu.memory_space<vmem>>, %arg3: memref<1x128xi32, #tpu.memory_space<vmem>>, %arg4: memref<128x1xi32, #tpu.memory_space<vmem>>, %arg5: memref<1x128xf32, #tpu.memory_space<vmem>>, %arg6: memref<1x128xf32, #tpu.memory_space<vmem>>, %arg7: memref<1x128xf32, #tpu.memory_space<vmem>>, %arg8: memref<1x128xf32, #tpu.memory_space<vmem>>, %arg9: memref<1x128xf32, #tpu.memory_space<vmem>>, %arg10: memref<8x128xf32, #tpu.memory_space<vmem>>) attributes {dimension_semantics = [#tpu.dimension_semantics<parallel>, #tpu.dimension_semantics<arbitrary>], iteration_bounds = array<i64: 1, 1>, scalar_prefetch = 0 : i64, scratch_operands = 5 : i64, tpu.core_type = #tpu.core_type<tc>, window_params = [{transform_indices = @transform_0, window_bounds = array<i64: 128, 8>}, {transform_indices = @transform_1, window_bounds = array<i64: 1, 128>}, {transform_indices = @transform_2, window_bounds = array<i64: 128, 1>}, {transform_indices = @transform_3, window_bounds = array<i64: 1, 128>}]} {
    %c128_i32 = arith.constant 128 : i32
    %0 = arith.muli %arg0, %c128_i32 : i32
    %c128_i32_0 = arith.constant 128 : i32
    %1 = arith.muli %arg1, %c128_i32_0 : i32
    %c0_i32 = arith.constant 0 : i32
    %2 = arith.cmpi eq, %arg1, %c0_i32 : i32
    %3 = arith.extui %2 : i1 to i32
    %c0_i32_1 = arith.constant 0 : i32
    %4 = arith.cmpi ne, %3, %c0_i32_1 : i32
    scf.if %4 {
      %cst_16 = arith.constant 0xFF800000 : f32
      %25 = vector.broadcast %cst_16 : f32 to vector<1x128xf32>
      %c0_17 = arith.constant 0 : index
      %c0_18 = arith.constant 0 : index
      %26 = vector.load %arg6[%c0_17, %c0_18] : memref<1x128xf32, #tpu.memory_space<vmem>>, vector<1x128xf32>
      tpu.vector_store %arg6[%c0_17, %c0_18], %25 {strides = array<i32>} : memref<1x128xf32, #tpu.memory_space<vmem>>, vector<1x128xf32>,
      %cst_19 = arith.constant 0.000000e+00 : f32
      %27 = vector.broadcast %cst_19 : f32 to vector<1x128xf32>
      %c0_20 = arith.constant 0 : index
      %c0_21 = arith.constant 0 : index
      %28 = vector.load %arg7[%c0_20, %c0_21] : memref<1x128xf32, #tpu.memory_space<vmem>>, vector<1x128xf32>
      tpu.vector_store %arg7[%c0_20, %c0_21], %27 {strides = array<i32>} : memref<1x128xf32, #tpu.memory_space<vmem>>, vector<1x128xf32>,
      %cst_22 = arith.constant 0.000000e+00 : f32
      %29 = vector.broadcast %cst_22 : f32 to vector<1x128xf32>
      %c0_23 = arith.constant 0 : index
      %c0_24 = arith.constant 0 : index
      %30 = vector.load %arg8[%c0_23, %c0_24] : memref<1x128xf32, #tpu.memory_space<vmem>>, vector<1x128xf32>
      tpu.vector_store %arg8[%c0_23, %c0_24], %29 {strides = array<i32>} : memref<1x128xf32, #tpu.memory_space<vmem>>, vector<1x128xf32>,
      %cst_25 = arith.constant 0.000000e+00 : f32
      %31 = vector.broadcast %cst_25 : f32 to vector<1x128xf32>
      %c0_26 = arith.constant 0 : index
      %c0_27 = arith.constant 0 : index
      %32 = vector.load %arg9[%c0_26, %c0_27] : memref<1x128xf32, #tpu.memory_space<vmem>>, vector<1x128xf32>
      tpu.vector_store %arg9[%c0_26, %c0_27], %31 {strides = array<i32>} : memref<1x128xf32, #tpu.memory_space<vmem>>, vector<1x128xf32>,
      %33 = tpu.iota {dimensions = array<i32: 0>} : vector<8x128xi32>
      %c0_28 = arith.constant 0 : index
      %c0_29 = arith.constant 0 : index
      %34 = vector.load %arg3[%c0_28, %c0_29] : memref<1x128xi32, #tpu.memory_space<vmem>>, vector<1x128xi32>
      %35 = vector.broadcast %34 : vector<1x128xi32> to vector<8x128xi32>
      %36 = arith.cmpi eq, %33, %35 : vector<8x128xi32>
      %37 = arith.extui %36 : vector<8x128xi1> to vector<8x128xi32>
      %38 = arith.sitofp %37 : vector<8x128xi32> to vector<8x128xf32>
      %c0_30 = arith.constant 0 : index
      %c0_31 = arith.constant 0 : index
      %39 = vector.load %arg10[%c0_30, %c0_31] : memref<8x128xf32, #tpu.memory_space<vmem>>, vector<8x128xf32>
      tpu.vector_store %arg10[%c0_30, %c0_31], %38 {strides = array<i32>} : memref<8x128xf32, #tpu.memory_space<vmem>>, vector<8x128xf32>,
    } else {
    }
    %c0 = arith.constant 0 : index
    %c0_2 = arith.constant 0 : index
    %5 = vector.load %arg2[%c0, %c0_2] : memref<128x8xf32, #tpu.memory_space<vmem>>, vector<128x8xf32>
    %c0_3 = arith.constant 0 : index
    %c0_4 = arith.constant 0 : index
    %6 = vector.load %arg10[%c0_3, %c0_4] : memref<8x128xf32, #tpu.memory_space<vmem>>, vector<8x128xf32>
    %cst = arith.constant dense<0.000000e+00> : vector<128x128xf32>
    %7 = tpu.matmul %5, %6, %cst {dimension_numbers = #tpu.dot_dimension_numbers<[1], [0], [0], [1], [0, 0, 1, 1], [], []>} : vector<128x8xf32>, vector<8x128xf32>, vector<128x128xf32> -> vector<128x128xf32>
    %c0_5 = arith.constant 0 : index
    %c0_6 = arith.constant 0 : index
    %8 = vector.load %arg3[%c0_5, %c0_6] : memref<1x128xi32, #tpu.memory_space<vmem>>, vector<1x128xi32>
    %c0_7 = arith.constant 0 : index
    %c0_8 = arith.constant 0 : index
    %9 = vector.load %arg4[%c0_7, %c0_8] : memref<128x1xi32, #tpu.memory_space<vmem>>, vector<128x1xi32>
    %c0_i32_9 = arith.constant 0 : i32
    %10 = vector.broadcast %c0_i32_9 : i32 to vector<128x1xi32>
    %11 = arith.cmpi sge, %9, %10 : vector<128x1xi32>
    %c128_i32_10 = arith.constant 128 : i32
    %12 = arith.addi %0, %c128_i32_10 : i32
    %13 = arith.cmpi slt, %1, %12 : i32
    %c128_i32_11 = arith.constant 128 : i32
    %14 = arith.addi %1, %c128_i32_11 : i32
    %15 = arith.cmpi slt, %0, %14 : i32
    %16 = arith.andi %13, %15 : i1
    %17 = arith.extui %16 : i1 to i32
    %c0_i32_12 = arith.constant 0 : i32
    %18 = arith.cmpi ne, %17, %c0_i32_12 : i32
    scf.if %18 {
      %25 = tpu.iota {dimensions = array<i32: 0>} : vector<128x128xi32>
      %26 = vector.broadcast %1 : i32 to vector<128x128xi32>
      %27 = arith.addi %26, %25 : vector<128x128xi32>
      %28 = tpu.iota {dimensions = array<i32: 1>} : vector<128x128xi32>
      %29 = vector.broadcast %0 : i32 to vector<128x128xi32>
      %30 = arith.addi %29, %28 : vector<128x128xi32>
      %31 = arith.cmpi ne, %27, %30 : vector<128x128xi32>
      %32 = vector.broadcast %11 : vector<128x1xi1> to vector<128x128xi1>
      %33 = arith.andi %32, %31 : vector<128x128xi1>
      %34 = vector.broadcast %9 : vector<128x1xi32> to vector<128x128xi32>
      %35 = vector.broadcast %8 : vector<1x128xi32> to vector<128x128xi32>
      %36 = arith.cmpi eq, %34, %35 : vector<128x128xi32>
      %37 = arith.andi %36, %33 : vector<128x128xi1>
      %c0_16 = arith.constant 0 : index
      %c0_17 = arith.constant 0 : index
      %38 = vector.load %arg8[%c0_16, %c0_17] : memref<1x128xf32, #tpu.memory_space<vmem>>, vector<1x128xf32>
      %cst_18 = arith.constant 0.000000e+00 : f32
      %39 = vector.broadcast %cst_18 : f32 to vector<128x128xf32>
      %40 = arith.select %37, %7, %39 : vector<128x128xi1>, vector<128x128xf32>
      %cst_19 = arith.constant dense<0.000000e+00> : vector<128xf32>
      %41 = vector.multi_reduction <add>, %40, %cst_19 [0] : vector<128x128xf32> to vector<128xf32>
      %42 = vector.shape_cast %41 : vector<128xf32> to vector<1x128xf32>
      %43 = arith.addf %38, %42 : vector<1x128xf32>
      %c0_20 = arith.constant 0 : index
      %c0_21 = arith.constant 0 : index
      %44 = vector.load %arg8[%c0_20, %c0_21] : memref<1x128xf32, #tpu.memory_space<vmem>>, vector<1x128xf32>
      tpu.vector_store %arg8[%c0_20, %c0_21], %43 {strides = array<i32>} : memref<1x128xf32, #tpu.memory_space<vmem>>, vector<1x128xf32>,
      %c0_22 = arith.constant 0 : index
      %c0_23 = arith.constant 0 : index
      %45 = vector.load %arg9[%c0_22, %c0_23] : memref<1x128xf32, #tpu.memory_space<vmem>>, vector<1x128xf32>
      %46 = arith.extui %37 : vector<128x128xi1> to vector<128x128xi32>
      %47 = arith.sitofp %46 : vector<128x128xi32> to vector<128x128xf32>
      %cst_24 = arith.constant dense<0.000000e+00> : vector<128xf32>
      %48 = vector.multi_reduction <add>, %47, %cst_24 [0] : vector<128x128xf32> to vector<128xf32>
      %49 = vector.shape_cast %48 : vector<128xf32> to vector<1x128xf32>
      %50 = arith.addf %45, %49 : vector<1x128xf32>
      %c0_25 = arith.constant 0 : index
      %c0_26 = arith.constant 0 : index
      %51 = vector.load %arg9[%c0_25, %c0_26] : memref<1x128xf32, #tpu.memory_space<vmem>>, vector<1x128xf32>
      tpu.vector_store %arg9[%c0_25, %c0_26], %50 {strides = array<i32>} : memref<1x128xf32, #tpu.memory_space<vmem>>, vector<1x128xf32>,
      %c0_27 = arith.constant 0 : index
      %c0_28 = arith.constant 0 : index
      %52 = vector.load %arg6[%c0_27, %c0_28] : memref<1x128xf32, #tpu.memory_space<vmem>>, vector<1x128xf32>
      %cst_29 = arith.constant dense<0xFF800000> : vector<128xf32>
      %53 = vector.multi_reduction <maximumf>, %7, %cst_29 [0] : vector<128x128xf32> to vector<128xf32>
      %54 = vector.shape_cast %53 : vector<128xf32> to vector<1x128xf32>
      %55 = arith.maximumf %52, %54 : vector<1x128xf32>
      %56 = vector.broadcast %55 : vector<1x128xf32> to vector<128x128xf32>
      %57 = arith.subf %7, %56 : vector<128x128xf32>
      %58 = math.exp %57 : vector<128x128xf32>
      %cst_30 = arith.constant 0.000000e+00 : f32
      %59 = vector.broadcast %cst_30 : f32 to vector<128x128xf32>
      %60 = arith.select %33, %58, %59 : vector<128x128xi1>, vector<128x128xf32>
      %61 = arith.subf %52, %55 : vector<1x128xf32>
      %62 = math.exp %61 : vector<1x128xf32>
      %c0_31 = arith.constant 0 : index
      %c0_32 = arith.constant 0 : index
      %63 = vector.load %arg7[%c0_31, %c0_32] : memref<1x128xf32, #tpu.memory_space<vmem>>, vector<1x128xf32>
      %64 = arith.mulf %62, %63 : vector<1x128xf32>
      %cst_33 = arith.constant dense<0.000000e+00> : vector<128xf32>
      %65 = vector.multi_reduction <add>, %60, %cst_33 [0] : vector<128x128xf32> to vector<128xf32>
      %66 = vector.shape_cast %65 : vector<128xf32> to vector<1x128xf32>
      %67 = arith.addf %64, %66 : vector<1x128xf32>
      %c0_34 = arith.constant 0 : index
      %c0_35 = arith.constant 0 : index
      %68 = vector.load %arg7[%c0_34, %c0_35] : memref<1x128xf32, #tpu.memory_space<vmem>>, vector<1x128xf32>
      tpu.vector_store %arg7[%c0_34, %c0_35], %67 {strides = array<i32>} : memref<1x128xf32, #tpu.memory_space<vmem>>, vector<1x128xf32>,
      %c0_36 = arith.constant 0 : index
      %c0_37 = arith.constant 0 : index
      %69 = vector.load %arg6[%c0_36, %c0_37] : memref<1x128xf32, #tpu.memory_space<vmem>>, vector<1x128xf32>
      tpu.vector_store %arg6[%c0_36, %c0_37], %55 {strides = array<i32>} : memref<1x128xf32, #tpu.memory_space<vmem>>, vector<1x128xf32>,
    } else {
    }
    %true = arith.constant true
    %19 = arith.xori %16, %true : i1
    %20 = arith.extui %19 : i1 to i32
    %c0_i32_13 = arith.constant 0 : i32
    %21 = arith.cmpi ne, %20, %c0_i32_13 : i32
    scf.if %21 {
      %25 = vector.broadcast %9 : vector<128x1xi32> to vector<128x128xi32>
      %26 = vector.broadcast %8 : vector<1x128xi32> to vector<128x128xi32>
      %27 = arith.cmpi eq, %25, %26 : vector<128x128xi32>
      %28 = vector.broadcast %11 : vector<128x1xi1> to vector<128x128xi1>
      %29 = arith.andi %27, %28 : vector<128x128xi1>
      %c0_16 = arith.constant 0 : index
      %c0_17 = arith.constant 0 : index
      %30 = vector.load %arg8[%c0_16, %c0_17] : memref<1x128xf32, #tpu.memory_space<vmem>>, vector<1x128xf32>
      %cst_18 = arith.constant 0.000000e+00 : f32
      %31 = vector.broadcast %cst_18 : f32 to vector<128x128xf32>
      %32 = arith.select %29, %7, %31 : vector<128x128xi1>, vector<128x128xf32>
      %cst_19 = arith.constant dense<0.000000e+00> : vector<128xf32>
      %33 = vector.multi_reduction <add>, %32, %cst_19 [0] : vector<128x128xf32> to vector<128xf32>
      %34 = vector.shape_cast %33 : vector<128xf32> to vector<1x128xf32>
      %35 = arith.addf %30, %34 : vector<1x128xf32>
      %c0_20 = arith.constant 0 : index
      %c0_21 = arith.constant 0 : index
      %36 = vector.load %arg8[%c0_20, %c0_21] : memref<1x128xf32, #tpu.memory_space<vmem>>, vector<1x128xf32>
      tpu.vector_store %arg8[%c0_20, %c0_21], %35 {strides = array<i32>} : memref<1x128xf32, #tpu.memory_space<vmem>>, vector<1x128xf32>,
      %c0_22 = arith.constant 0 : index
      %c0_23 = arith.constant 0 : index
      %37 = vector.load %arg9[%c0_22, %c0_23] : memref<1x128xf32, #tpu.memory_space<vmem>>, vector<1x128xf32>
      %38 = arith.extui %29 : vector<128x128xi1> to vector<128x128xi32>
      %39 = arith.sitofp %38 : vector<128x128xi32> to vector<128x128xf32>
      %cst_24 = arith.constant dense<0.000000e+00> : vector<128xf32>
      %40 = vector.multi_reduction <add>, %39, %cst_24 [0] : vector<128x128xf32> to vector<128xf32>
      %41 = vector.shape_cast %40 : vector<128xf32> to vector<1x128xf32>
      %42 = arith.addf %37, %41 : vector<1x128xf32>
      %c0_25 = arith.constant 0 : index
      %c0_26 = arith.constant 0 : index
      %43 = vector.load %arg9[%c0_25, %c0_26] : memref<1x128xf32, #tpu.memory_space<vmem>>, vector<1x128xf32>
      tpu.vector_store %arg9[%c0_25, %c0_26], %42 {strides = array<i32>} : memref<1x128xf32, #tpu.memory_space<vmem>>, vector<1x128xf32>,
      %c0_27 = arith.constant 0 : index
      %c0_28 = arith.constant 0 : index
      %44 = vector.load %arg6[%c0_27, %c0_28] : memref<1x128xf32, #tpu.memory_space<vmem>>, vector<1x128xf32>
      %cst_29 = arith.constant dense<0xFF800000> : vector<128xf32>
      %45 = vector.multi_reduction <maximumf>, %7, %cst_29 [0] : vector<128x128xf32> to vector<128xf32>
      %46 = vector.shape_cast %45 : vector<128xf32> to vector<1x128xf32>
      %47 = arith.maximumf %44, %46 : vector<1x128xf32>
      %48 = vector.broadcast %47 : vector<1x128xf32> to vector<128x128xf32>
      %49 = arith.subf %7, %48 : vector<128x128xf32>
      %50 = math.exp %49 : vector<128x128xf32>
      %cst_30 = arith.constant 0.000000e+00 : f32
      %51 = vector.shape_cast %11 : vector<128x1xi1> to vector<128x1xi1>
      %52 = vector.broadcast %51 : vector<128x1xi1> to vector<128x128xi1>
      %53 = vector.broadcast %cst_30 : f32 to vector<128x128xf32>
      %54 = arith.select %52, %50, %53 : vector<128x128xi1>, vector<128x128xf32>
      %55 = arith.subf %44, %47 : vector<1x128xf32>
      %56 = math.exp %55 : vector<1x128xf32>
      %c0_31 = arith.constant 0 : index
      %c0_32 = arith.constant 0 : index
      %57 = vector.load %arg7[%c0_31, %c0_32] : memref<1x128xf32, #tpu.memory_space<vmem>>, vector<1x128xf32>
      %58 = arith.mulf %56, %57 : vector<1x128xf32>
      %cst_33 = arith.constant dense<0.000000e+00> : vector<128xf32>
      %59 = vector.multi_reduction <add>, %54, %cst_33 [0] : vector<128x128xf32> to vector<128xf32>
      %60 = vector.shape_cast %59 : vector<128xf32> to vector<1x128xf32>
      %61 = arith.addf %58, %60 : vector<1x128xf32>
      %c0_34 = arith.constant 0 : index
      %c0_35 = arith.constant 0 : index
      %62 = vector.load %arg7[%c0_34, %c0_35] : memref<1x128xf32, #tpu.memory_space<vmem>>, vector<1x128xf32>
      tpu.vector_store %arg7[%c0_34, %c0_35], %61 {strides = array<i32>} : memref<1x128xf32, #tpu.memory_space<vmem>>, vector<1x128xf32>,
      %c0_36 = arith.constant 0 : index
      %c0_37 = arith.constant 0 : index
      %63 = vector.load %arg6[%c0_36, %c0_37] : memref<1x128xf32, #tpu.memory_space<vmem>>, vector<1x128xf32>
      tpu.vector_store %arg6[%c0_36, %c0_37], %47 {strides = array<i32>} : memref<1x128xf32, #tpu.memory_space<vmem>>, vector<1x128xf32>,
    } else {
    }
    %c0_i32_14 = arith.constant 0 : i32
    %22 = arith.cmpi eq, %arg1, %c0_i32_14 : i32
    %23 = arith.extui %22 : i1 to i32
    %c0_i32_15 = arith.constant 0 : i32
    %24 = arith.cmpi ne, %23, %c0_i32_15 : i32
    scf.if %24 {
      %c0_16 = arith.constant 0 : index
      %c0_17 = arith.constant 0 : index
      %25 = vector.load %arg6[%c0_16, %c0_17] : memref<1x128xf32, #tpu.memory_space<vmem>>, vector<1x128xf32>
      %c0_18 = arith.constant 0 : index
      %c0_19 = arith.constant 0 : index
      %26 = vector.load %arg7[%c0_18, %c0_19] : memref<1x128xf32, #tpu.memory_space<vmem>>, vector<1x128xf32>
      %27 = math.log %26 : vector<1x128xf32>
      %28 = arith.addf %25, %27 : vector<1x128xf32>
      %c0_20 = arith.constant 0 : index
      %c0_21 = arith.constant 0 : index
      %29 = vector.load %arg8[%c0_20, %c0_21] : memref<1x128xf32, #tpu.memory_space<vmem>>, vector<1x128xf32>
      %c0_22 = arith.constant 0 : index
      %c0_23 = arith.constant 0 : index
      %30 = vector.load %arg9[%c0_22, %c0_23] : memref<1x128xf32, #tpu.memory_space<vmem>>, vector<1x128xf32>
      %31 = arith.divf %29, %30 : vector<1x128xf32>
      %32 = arith.subf %31, %28 : vector<1x128xf32>
      %c0_i32_24 = arith.constant 0 : i32
      %33 = vector.broadcast %c0_i32_24 : i32 to vector<1x128xi32>
      %34 = arith.cmpi sge, %8, %33 : vector<1x128xi32>
      %cst_25 = arith.constant -6.250000e-02 : f32
      %35 = vector.broadcast %cst_25 : f32 to vector<1x128xf32>
      %36 = arith.mulf %35, %32 : vector<1x128xf32>
      %cst_26 = arith.constant 0.000000e+00 : f32
      %37 = vector.broadcast %cst_26 : f32 to vector<1x128xf32>
      %38 = arith.select %34, %36, %37 : vector<1x128xi1>, vector<1x128xf32>
      %c0_27 = arith.constant 0 : index
      %c0_28 = arith.constant 0 : index
      %39 = vector.load %arg5[%c0_27, %c0_28] : memref<1x128xf32, #tpu.memory_space<vmem>>, vector<1x128xf32>
      tpu.vector_store %arg5[%c0_27, %c0_28], %38 {strides = array<i32>} : memref<1x128xf32, #tpu.memory_space<vmem>>, vector<1x128xf32>,
    } else {
    }
    return
  }
  func.func @transform_0(%arg0: i32, %arg1: i32) -> (i32, i32) {
    %c0_i32 = arith.constant 0 : i32
    %c0_i32_0 = arith.constant 0 : i32
    return %arg1, %c0_i32 : i32, i32
  }
  func.func @transform_1(%arg0: i32, %arg1: i32) -> (i32, i32) {
    %c0_i32 = arith.constant 0 : i32
    %c0_i32_0 = arith.constant 0 : i32
    return %c0_i32, %arg0 : i32, i32
  }
  func.func @transform_2(%arg0: i32, %arg1: i32) -> (i32, i32) {
    %c0_i32 = arith.constant 0 : i32
    %c0_i32_0 = arith.constant 0 : i32
    return %arg1, %c0_i32 : i32, i32
  }
  func.func @transform_3(%arg0: i32, %arg1: i32) -> (i32, i32) {
    %c0_i32 = arith.constant 0 : i32
    %c0_i32_0 = arith.constant 0 : i32
    return %c0_i32, %arg0 : i32, i32
  }
}

</mosaic_0001>

<llo_original>
// kernel: tpu_custom_call.1
$region0: #{tpu_custom_call.1}
  #allocation0 [shape = 'u32[]', space=smem, size = 0x4, offset = 0x4, fixed_abs, tag = 'smem constant byte address 0x4 - core index']
  #allocation1 [shape = 'u32[144,128]{1,0:T(1,128)}', space=vmem, size = 0x12000, scoped, tag = 'internal scratch']
  #allocation2 [shape = 'f32[1,128]{1,0:T(1,128)}', space=vmem, size = 0x200, scoped, tag = 'scratch operand']
  #allocation3 [shape = 'f32[1,128]{1,0:T(1,128)}', space=vmem, size = 0x200, scoped, tag = 'scratch operand']
  #allocation4 [shape = 'f32[1,128]{1,0:T(1,128)}', space=vmem, size = 0x200, scoped, tag = 'scratch operand']
  #allocation5 [shape = 'f32[1,128]{1,0:T(1,128)}', space=vmem, size = 0x200, scoped, tag = 'scratch operand']
  #allocation6 [shape = 'f32[8,128]{1,0:T(8,128)}', space=vmem, size = 0x1000, scoped, tag = 'scratch operand']
  %s0 = inlined_call_operand.vmem [shape: f32[128,8], index: 0, kind: input, shape index: {}]
  %s1 = inlined_call_operand.vmem [shape: s32[1,128], index: 1, kind: input, shape index: {}]
  %s2 = inlined_call_operand.vmem [shape: s32[128,1], index: 2, kind: input, shape index: {}]
  %s3 = inlined_call_operand.hbm [shape: f32[1,128], index: 3, kind: output, shape index: {}]
  %s4 = sld [smem:[#allocation0]]
  $region38: #{tpu_custom_call.1} parent=0
    _
  %s6 = ssub.s32 1, %s4
  %s7 = scalar_select 0, %s6, %s4
  $region1: #{tpu_custom_call.1} parent=0
    #allocation7 [shape = 'u8[512]{0}', space=vmem, size = 0x400, scoped, tag = 'output window, operand 0, single buffered']
    #allocation8 [shape = 's32[1]{0}', space=sflag, size = 0x4, scoped, tag = 'scoped memory for tpu_custom_call.1']
    %8 = vsyncpa [#allocation8], 0
    // Predicated region
    $region2: #{tpu_custom_call.1} parent=1 // pred_check
      _
    $region3: #{tpu_custom_call.1} parent=1 // pred_check_branch
      %10 = sbr.rel (0) target = $region5
    $region4: #{tpu_custom_call.1} parent=1 // pred_region
      _
    $region5: #{tpu_custom_call.1} parent=1 // pred_fallthru
      _
    // Predicated region
    $region6: #{tpu_custom_call.1} parent=1 // pred_check
      _
    $region7: #{tpu_custom_call.1} parent=1 // pred_check_branch
      %12 = sbr.rel (0) target = $region9
    $region8: #{tpu_custom_call.1} parent=1 // pred_region
      _
    $region9: #{tpu_custom_call.1} parent=1 // pred_fallthru
      _
    // Predicated region
    $region10: #{tpu_custom_call.1} parent=1 // pred_check
      _
    $region11: #{tpu_custom_call.1} parent=1 // pred_check_branch
      %14 = sbr.rel (0) target = $region13
    $region12: #{tpu_custom_call.1} parent=1 // pred_region
      _
    $region13: #{tpu_custom_call.1} parent=1 // pred_fallthru
      _
    %s15 = smul.u32 0, 128
    %s16 = smul.u32 0, 128
    %p17 = scmp.eq.s32.totalorder 0, 0
    // Predicated region
    $region14: #{tpu_custom_call.1} parent=1 // pred_check
      %p18 = pneg %p17
    $region15: #{tpu_custom_call.1} parent=1 // pred_check_branch
      %20 = sbr.rel (%p18) target = $region17
    $region16: #{tpu_custom_call.1} parent=1 // pred_region
      %21 = vst [vmem:[#allocation2] sm:$0x1] -inf
      %22 = vst [vmem:[#allocation3] sm:$0x1] 0.0
      %23 = vst [vmem:[#allocation4] sm:$0x1] 0.0
      %24 = vst [vmem:[#allocation5] sm:$0x1] 0.0
      %v25 = vlaneseq
      %v26 = vshrl.u32 %v25, 7
      %v27 = vld [vmem:[%s1] sm:$0x1]
      %v28 = vlaneseq
      %v29 = vshrl.u32 %v28, 7
      %v30 = vsub.s32 0, %v29
      %v31 = vrot.slane %v27, %v30
      %vm32 = vcmp.eq.s32.totalorder %v26, %v31
      %v33 = vsel %vm32, 1, 0
      %v34 = vcvt.s32.f32 %v33
      %35 = vst [vmem:[#allocation6] sm:$0xff] %v34
    $region17: #{tpu_custom_call.1} parent=1 // pred_fallthru
      _
    %v36 = vld [vmem:[%s0] sm:$0xff]
    %v37 = vld [vmem:[%s0 + $0x8] sm:$0xff]
    %v38 = vld [vmem:[%s0 + $0x10] sm:$0xff]
    %v39 = vld [vmem:[%s0 + $0x18] sm:$0xff]
    %v40 = vld [vmem:[%s0 + $0x20] sm:$0xff]
    %v41 = vld [vmem:[%s0 + $0x28] sm:$0xff]
    %v42 = vld [vmem:[%s0 + $0x30] sm:$0xff]
    %v43 = vld [vmem:[%s0 + $0x38] sm:$0xff]
    %v44 = vld [vmem:[%s0 + $0x40] sm:$0xff]
    %v45 = vld [vmem:[%s0 + $0x48] sm:$0xff]
    %v46 = vld [vmem:[%s0 + $0x50] sm:$0xff]
    %v47 = vld [vmem:[%s0 + $0x58] sm:$0xff]
    %v48 = vld [vmem:[%s0 + $0x60] sm:$0xff]
    %v49 = vld [vmem:[%s0 + $0x68] sm:$0xff]
    %v50 = vld [vmem:[%s0 + $0x70] sm:$0xff]
    %v51 = vld [vmem:[%s0 + $0x78] sm:$0xff]
    %v52 = vld [vmem:[#allocation6] sm:$0xff]
    %vm53 = vcmask 64512
    %v55 = vsel %vm53, %v36, 0
    %v58 = vsel %vm53, %v37, 0
    %v61 = vsel %vm53, %v38, 0
    %v64 = vsel %vm53, %v39, 0
    %v67 = vsel %vm53, %v40, 0
    %v70 = vsel %vm53, %v41, 0
    %v73 = vsel %vm53, %v42, 0
    %v76 = vsel %vm53, %v43, 0
    %v79 = vsel %vm53, %v44, 0
    %v82 = vsel %vm53, %v45, 0
    %v85 = vsel %vm53, %v46, 0
    %v88 = vsel %vm53, %v47, 0
    %v91 = vsel %vm53, %v48, 0
    %v94 = vsel %vm53, %v49, 0
    %v97 = vsel %vm53, %v50, 0
    %v100 = vsel %vm53, %v51, 0
    %102 = vmatprep.subr.mxu0 0.0
    %103 = vmatpush1.msra.mxu0 %v52
    %104 = vmatprep.subr.mxu0 0.0
    %105 = vmatpush1.msra.mxu0 0.0
    %106 = vmatprep.subr.mxu0 0.0
    %107 = vmatpush1.msra.mxu0 0.0
    %108 = vmatprep.subr.mxu0 0.0
    %109 = vmatpush1.msra.mxu0 0.0
    %110 = vmatprep.subr.mxu0 0.0
    %111 = vmatpush1.msra.mxu0 0.0
    %112 = vmatprep.subr.mxu0 0.0
    %113 = vmatpush1.msra.mxu0 0.0
    %114 = vmatprep.subr.mxu0 0.0
    %115 = vmatpush1.msra.mxu0 0.0
    %116 = vmatprep.subr.mxu0 0.0
    %117 = vmatpush1.msra.mxu0 0.0
    %118 = vmatprep.subr.mxu0 0.0
    %119 = vmatpush1.msra.mxu0 0.0
    %120 = vmatprep.subr.mxu0 0.0
    %121 = vmatpush1.msra.mxu0 0.0
    %122 = vmatprep.subr.mxu0 0.0
    %123 = vmatpush1.msra.mxu0 0.0
    %124 = vmatprep.subr.mxu0 0.0
    %125 = vmatpush1.msra.mxu0 0.0
    %126 = vmatprep.subr.mxu0 0.0
    %127 = vmatpush1.msra.mxu0 0.0
    %128 = vmatprep.subr.mxu0 0.0
    %129 = vmatpush1.msra.mxu0 0.0
    %130 = vmatprep.subr.mxu0 0.0
    %131 = vmatpush1.msra.mxu0 0.0
    %132 = vmatprep.subr.mxu0 0.0
    %133 = vmatpush1.msra.mxu0 0.0
    %134 = vmatprep.subr.mxu0 0.0
    %135 = vmatpush1.msra.mxu0 0.0
    %136 = vmatprep.subr.mxu0 0.0
    %137 = vmatpush1.msra.mxu0 0.0
    %138 = vmatprep.subr.mxu0 0.0
    %139 = vmatpush1.msra.mxu0 0.0
    %140 = vmatprep.subr.mxu0 0.0
    %141 = vmatpush1.msra.mxu0 0.0
    %142 = vmatprep.subr.mxu0 0.0
    %143 = vmatpush1.msra.mxu0 0.0
    %144 = vmatprep.subr.mxu0 0.0
    %145 = vmatpush1.msra.mxu0 0.0
    %146 = vmatprep.subr.mxu0 0.0
    %147 = vmatpush1.msra.mxu0 0.0
    %148 = vmatprep.subr.mxu0 0.0
    %149 = vmatpush1.msra.mxu0 0.0
    %150 = vmatprep.subr.mxu0 0.0
    %151 = vmatpush1.msra.mxu0 0.0
    %152 = vmatprep.subr.mxu0 0.0
    %153 = vmatpush1.msra.mxu0 0.0
    %154 = vmatprep.subr.mxu0 0.0
    %155 = vmatpush1.msra.mxu0 0.0
    %156 = vmatprep.subr.mxu0 0.0
    %157 = vmatpush1.msra.mxu0 0.0
    %158 = vmatprep.subr.mxu0 0.0
    %159 = vmatpush1.msra.mxu0 0.0
    %160 = vmatprep.subr.mxu0 0.0
    %161 = vmatpush1.msra.mxu0 0.0
    %162 = vmatprep.subr.mxu0 0.0
    %163 = vmatpush1.msra.mxu0 0.0
    %164 = vmatprep.subr.mxu0 0.0
    %165 = vmatpush1.msra.mxu0 0.0
    %166 = vmatprep.mubr.f32.mxu0 0.0
    %167 = vmatmul.mubr.f32.gmra.mrb[0].mxu0 %v55
    %v168 = vpop.f32.mrb[0].mxu0
    %v169 = vadd.f32 0.0, %v168
    %v170 = vpop.f32.mrb[0].mxu0
    %171 = vmatprep.mubr.f32.mxu0 0.0
    %172 = vmatmul.mubr.f32.gmra.mrb[0].mxu0 %v58
    %v173 = vpop.f32.mrb[0].mxu0
    %v174 = vadd.f32 0.0, %v173
    %v175 = vpop.f32.mrb[0].mxu0
    %176 = vmatprep.mubr.f32.mxu0 0.0
    %177 = vmatmul.mubr.f32.gmra.mrb[0].mxu0 %v61
    %v178 = vpop.f32.mrb[0].mxu0
    %v179 = vadd.f32 0.0, %v178
    %v180 = vpop.f32.mrb[0].mxu0
    %181 = vmatprep.mubr.f32.mxu0 0.0
    %182 = vmatmul.mubr.f32.gmra.mrb[0].mxu0 %v64
    %v183 = vpop.f32.mrb[0].mxu0
    %v184 = vadd.f32 0.0, %v183
    %v185 = vpop.f32.mrb[0].mxu0
    %186 = vmatprep.mubr.f32.mxu0 0.0
    %187 = vmatmul.mubr.f32.gmra.mrb[0].mxu0 %v67
    %v188 = vpop.f32.mrb[0].mxu0
    %v189 = vadd.f32 0.0, %v188
    %v190 = vpop.f32.mrb[0].mxu0
    %191 = vmatprep.mubr.f32.mxu0 0.0
    %192 = vmatmul.mubr.f32.gmra.mrb[0].mxu0 %v70
    %v193 = vpop.f32.mrb[0].mxu0
    %v194 = vadd.f32 0.0, %v193
    %v195 = vpop.f32.mrb[0].mxu0
    %196 = vmatprep.mubr.f32.mxu0 0.0
    %197 = vmatmul.mubr.f32.gmra.mrb[0].mxu0 %v73
    %v198 = vpop.f32.mrb[0].mxu0
    %v199 = vadd.f32 0.0, %v198
    %v200 = vpop.f32.mrb[0].mxu0
    %201 = vmatprep.mubr.f32.mxu0 0.0
    %202 = vmatmul.mubr.f32.gmra.mrb[0].mxu0 %v76
    %v203 = vpop.f32.mrb[0].mxu0
    %v204 = vadd.f32 0.0, %v203
    %v205 = vpop.f32.mrb[0].mxu0
    %206 = vmatprep.mubr.f32.mxu0 0.0
    %207 = vmatmul.mubr.f32.gmra.mrb[0].mxu0 %v79
    %v208 = vpop.f32.mrb[0].mxu0
    %v209 = vadd.f32 0.0, %v208
    %v210 = vpop.f32.mrb[0].mxu0
    %211 = vmatprep.mubr.f32.mxu0 0.0
    %212 = vmatmul.mubr.f32.gmra.mrb[0].mxu0 %v82
    %v213 = vpop.f32.mrb[0].mxu0
    %v214 = vadd.f32 0.0, %v213
    %v215 = vpop.f32.mrb[0].mxu0
    %216 = vmatprep.mubr.f32.mxu0 0.0
    %217 = vmatmul.mubr.f32.gmra.mrb[0].mxu0 %v85
    %v218 = vpop.f32.mrb[0].mxu0
    %v219 = vadd.f32 0.0, %v218
    %v220 = vpop.f32.mrb[0].mxu0
    %221 = vmatprep.mubr.f32.mxu0 0.0
    %222 = vmatmul.mubr.f32.gmra.mrb[0].mxu0 %v88
    %v223 = vpop.f32.mrb[0].mxu0
    %v224 = vadd.f32 0.0, %v223
    %v225 = vpop.f32.mrb[0].mxu0
    %226 = vmatprep.mubr.f32.mxu0 0.0
    %227 = vmatmul.mubr.f32.gmra.mrb[0].mxu0 %v91
    %v228 = vpop.f32.mrb[0].mxu0
    %v229 = vadd.f32 0.0, %v228
    %v230 = vpop.f32.mrb[0].mxu0
    %231 = vmatprep.mubr.f32.mxu0 0.0
    %232 = vmatmul.mubr.f32.gmra.mrb[0].mxu0 %v94
    %v233 = vpop.f32.mrb[0].mxu0
    %v234 = vadd.f32 0.0, %v233
    %v235 = vpop.f32.mrb[0].mxu0
    %236 = vmatprep.mubr.f32.mxu0 0.0
    %237 = vmatmul.mubr.f32.gmra.mrb[0].mxu0 %v97
    %v238 = vpop.f32.mrb[0].mxu0
    %v239 = vadd.f32 0.0, %v238
    %v240 = vpop.f32.mrb[0].mxu0
    %241 = vmatprep.mubr.f32.mxu0 0.0
    %242 = vmatmul.mubr.f32.gmra.mrb[0].mxu0 %v100
    %v243 = vpop.f32.mrb[0].mxu0
    %v244 = vadd.f32 0.0, %v243
    %v245 = vpop.f32.mrb[0].mxu0
    %246 = vdwg.mxu0
    %v247 = vld [vmem:[%s1] sm:$0x1]
    %v248 = vld [vmem:[%s2] sm:$0xff]
    %v249 = vld [vmem:[%s2 + $0x8] sm:$0xff]
    %v250 = vld [vmem:[%s2 + $0x10] sm:$0xff]
    %v251 = vld [vmem:[%s2 + $0x18] sm:$0xff]
    %v252 = vld [vmem:[%s2 + $0x20] sm:$0xff]
    %v253 = vld [vmem:[%s2 + $0x28] sm:$0xff]
    %v254 = vld [vmem:[%s2 + $0x30] sm:$0xff]
    %v255 = vld [vmem:[%s2 + $0x38] sm:$0xff]
    %v256 = vld [vmem:[%s2 + $0x40] sm:$0xff]
    %v257 = vld [vmem:[%s2 + $0x48] sm:$0xff]
    %v258 = vld [vmem:[%s2 + $0x50] sm:$0xff]
    %v259 = vld [vmem:[%s2 + $0x58] sm:$0xff]
    %v260 = vld [vmem:[%s2 + $0x60] sm:$0xff]
    %v261 = vld [vmem:[%s2 + $0x68] sm:$0xff]
    %v262 = vld [vmem:[%s2 + $0x70] sm:$0xff]
    %v263 = vld [vmem:[%s2 + $0x78] sm:$0xff]
    %vm264 = vcmp.ge.s32.totalorder %v248, 0
    %vm265 = vcmp.ge.s32.totalorder %v249, 0
    %vm266 = vcmp.ge.s32.totalorder %v250, 0
    %vm267 = vcmp.ge.s32.totalorder %v251, 0
    %vm268 = vcmp.ge.s32.totalorder %v252, 0
    %vm269 = vcmp.ge.s32.totalorder %v253, 0
    %vm270 = vcmp.ge.s32.totalorder %v254, 0
    %vm271 = vcmp.ge.s32.totalorder %v255, 0
    %vm272 = vcmp.ge.s32.totalorder %v256, 0
    %vm273 = vcmp.ge.s32.totalorder %v257, 0
    %vm274 = vcmp.ge.s32.totalorder %v258, 0
    %vm275 = vcmp.ge.s32.totalorder %v259, 0
    %vm276 = vcmp.ge.s32.totalorder %v260, 0
    %vm277 = vcmp.ge.s32.totalorder %v261, 0
    %vm278 = vcmp.ge.s32.totalorder %v262, 0
    %vm279 = vcmp.ge.s32.totalorder %v263, 0
    %s280 = sadd.s32 %s15, 128
    %p281 = scmp.lt.s32.totalorder %s16, %s280
    %s282 = sadd.s32 %s16, 128
    %p283 = scmp.lt.s32.totalorder %s15, %s282
    %p284 = pnand %p281, %p283
    %p285 = pneg %p284
    // Predicated region
    $region18: #{tpu_custom_call.1} parent=1 // pred_check
      _
    $region19: #{tpu_custom_call.1} parent=1 // pred_check_branch
      %287 = sbr.rel (%p284) target = $region21
    $region20: #{tpu_custom_call.1} parent=1 // pred_region
      %v288 = vlaneseq
      %v289 = vshrl.u32 %v288, 7
      %v290 = vadd.s32 %v289, 8
      %v291 = vadd.s32 %v289, 16
      %v292 = vadd.s32 %v289, 24
      %v293 = vadd.s32 %v289, 32
      %v294 = vadd.s32 %v289, 40
      %v295 = vadd.s32 %v289, 48
      %v296 = vadd.s32 %v289, 56
      %v297 = vadd.s32 %v289, 64
      %v298 = vadd.s32 %v289, 72
      %v299 = vadd.s32 %v289, 80
      %v300 = vadd.s32 %v289, 88
      %v301 = vadd.s32 %v289, 96
      %v302 = vadd.s32 %v289, 104
      %v303 = vadd.s32 %v289, 112
      %v304 = vadd.s32 %v289, 120
      %v305 = vstv %s16
      %v306 = vadd.s32 %v305, %v289
      %v307 = vadd.s32 %v305, %v290
      %v308 = vadd.s32 %v305, %v291
      %v309 = vadd.s32 %v305, %v292
      %v310 = vadd.s32 %v305, %v293
      %v311 = vadd.s32 %v305, %v294
      %v312 = vadd.s32 %v305, %v295
      %v313 = vadd.s32 %v305, %v296
      %v314 = vadd.s32 %v305, %v297
      %v315 = vadd.s32 %v305, %v298
      %v316 = vadd.s32 %v305, %v299
      %v317 = vadd.s32 %v305, %v300
      %v318 = vadd.s32 %v305, %v301
      %v319 = vadd.s32 %v305, %v302
      %v320 = vadd.s32 %v305, %v303
      %v321 = vadd.s32 %v305, %v304
      %v322 = vlaneseq
      %v323 = vand.u32 %v322, 127
      %v324 = vstv %s15
      %v325 = vadd.s32 %v324, %v323
      %vm326 = vcmp.ne.s32.totalorder %v306, %v325
      %vm327 = vcmp.ne.s32.totalorder %v307, %v325
      %vm328 = vcmp.ne.s32.totalorder %v308, %v325
      %vm329 = vcmp.ne.s32.totalorder %v309, %v325
      %vm330 = vcmp.ne.s32.totalorder %v310, %v325
      %vm331 = vcmp.ne.s32.totalorder %v311, %v325
      %vm332 = vcmp.ne.s32.totalorder %v312, %v325
      %vm333 = vcmp.ne.s32.totalorder %v313, %v325
      %vm334 = vcmp.ne.s32.totalorder %v314, %v325
      %vm335 = vcmp.ne.s32.totalorder %v315, %v325
      %vm336 = vcmp.ne.s32.totalorder %v316, %v325
      %vm337 = vcmp.ne.s32.totalorder %v317, %v325
      %vm338 = vcmp.ne.s32.totalorder %v318, %v325
      %vm339 = vcmp.ne.s32.totalorder %v319, %v325
      %vm340 = vcmp.ne.s32.totalorder %v320, %v325
      %vm341 = vcmp.ne.s32.totalorder %v321, %v325
      %v342 = vsel %vm264, 1, 0
      %v343 = vsel %vm265, 1, 0
      %v344 = vsel %vm266, 1, 0
      %v345 = vsel %vm267, 1, 0
      %v346 = vsel %vm268, 1, 0
      %v347 = vsel %vm269, 1, 0
      %v348 = vsel %vm270, 1, 0
      %v349 = vsel %vm271, 1, 0
      %v350 = vsel %vm272, 1, 0
      %v351 = vsel %vm273, 1, 0
      %v352 = vsel %vm274, 1, 0
      %v353 = vsel %vm275, 1, 0
      %v354 = vsel %vm276, 1, 0
      %v355 = vsel %vm277, 1, 0
      %v356 = vsel %vm278, 1, 0
      %v357 = vsel %vm279, 1, 0
      %358 = vset.pattern.permute.xlu0 0
      %359 = vperm.xlu0 %358, %v342
      %v360 = vpop.permute.xlu0 %359
      %361 = vset.pattern.permute.xlu0 0
      %362 = vperm.xlu0 %361, %v343
      %v363 = vpop.permute.xlu0 %362
      %364 = vset.pattern.permute.xlu0 0
      %365 = vperm.xlu0 %364, %v344
      %v366 = vpop.permute.xlu0 %365
      %367 = vset.pattern.permute.xlu0 0
      %368 = vperm.xlu0 %367, %v345
      %v369 = vpop.permute.xlu0 %368
      %370 = vset.pattern.permute.xlu0 0
      %371 = vperm.xlu0 %370, %v346
      %v372 = vpop.permute.xlu0 %371
      %373 = vset.pattern.permute.xlu0 0
      %374 = vperm.xlu0 %373, %v347
      %v375 = vpop.permute.xlu0 %374
      %376 = vset.pattern.permute.xlu0 0
      %377 = vperm.xlu0 %376, %v348
      %v378 = vpop.permute.xlu0 %377
      %379 = vset.pattern.permute.xlu0 0
      %380 = vperm.xlu0 %379, %v349
      %v381 = vpop.permute.xlu0 %380
      %382 = vset.pattern.permute.xlu0 0
      %383 = vperm.xlu0 %382, %v350
      %v384 = vpop.permute.xlu0 %383
      %385 = vset.pattern.permute.xlu0 0
      %386 = vperm.xlu0 %385, %v351
      %v387 = vpop.permute.xlu0 %386
      %388 = vset.pattern.permute.xlu0 0
      %389 = vperm.xlu0 %388, %v352
      %v390 = vpop.permute.xlu0 %389
      %391 = vset.pattern.permute.xlu0 0
      %392 = vperm.xlu0 %391, %v353
      %v393 = vpop.permute.xlu0 %392
      %394 = vset.pattern.permute.xlu0 0
      %395 = vperm.xlu0 %394, %v354
      %v396 = vpop.permute.xlu0 %395
      %397 = vset.pattern.permute.xlu0 0
      %398 = vperm.xlu0 %397, %v355
      %v399 = vpop.permute.xlu0 %398
      %400 = vset.pattern.permute.xlu0 0
      %401 = vperm.xlu0 %400, %v356
      %v402 = vpop.permute.xlu0 %401
      %403 = vset.pattern.permute.xlu0 0
      %404 = vperm.xlu0 %403, %v357
      %v405 = vpop.permute.xlu0 %404
      %vm406 = vcmp.eq.s32.totalorder %v360, 1
      %vm407 = vcmp.eq.s32.totalorder %v363, 1
      %vm408 = vcmp.eq.s32.totalorder %v366, 1
      %vm409 = vcmp.eq.s32.totalorder %v369, 1
      %vm410 = vcmp.eq.s32.totalorder %v372, 1
      %vm411 = vcmp.eq.s32.totalorder %v375, 1
      %vm412 = vcmp.eq.s32.totalorder %v378, 1
      %vm413 = vcmp.eq.s32.totalorder %v381, 1
      %vm414 = vcmp.eq.s32.totalorder %v384, 1
      %vm415 = vcmp.eq.s32.totalorder %v387, 1
      %vm416 = vcmp.eq.s32.totalorder %v390, 1
      %vm417 = vcmp.eq.s32.totalorder %v393, 1
      %vm418 = vcmp.eq.s32.totalorder %v396, 1
      %vm419 = vcmp.eq.s32.totalorder %v399, 1
      %vm420 = vcmp.eq.s32.totalorder %v402, 1
      %vm421 = vcmp.eq.s32.totalorder %v405, 1
      %vm422 = vmand %vm406, %vm326
      %vm423 = vmand %vm407, %vm327
      %vm424 = vmand %vm408, %vm328
      %vm425 = vmand %vm409, %vm329
      %vm426 = vmand %vm410, %vm330
      %vm427 = vmand %vm411, %vm331
      %vm428 = vmand %vm412, %vm332
      %vm429 = vmand %vm413, %vm333
      %vm430 = vmand %vm414, %vm334
      %vm431 = vmand %vm415, %vm335
      %vm432 = vmand %vm416, %vm336
      %vm433 = vmand %vm417, %vm337
      %vm434 = vmand %vm418, %vm338
      %vm435 = vmand %vm419, %vm339
      %vm436 = vmand %vm420, %vm340
      %vm437 = vmand %vm421, %vm341
      %438 = vset.pattern.permute.xlu0 0
      %439 = vperm.xlu0 %438, %v248
      %v440 = vpop.permute.xlu0 %439
      %441 = vset.pattern.permute.xlu0 0
      %442 = vperm.xlu0 %441, %v249
      %v443 = vpop.permute.xlu0 %442
      %444 = vset.pattern.permute.xlu0 0
      %445 = vperm.xlu0 %444, %v250
      %v446 = vpop.permute.xlu0 %445
      %447 = vset.pattern.permute.xlu0 0
      %448 = vperm.xlu0 %447, %v251
      %v449 = vpop.permute.xlu0 %448
      %450 = vset.pattern.permute.xlu0 0
      %451 = vperm.xlu0 %450, %v252
      %v452 = vpop.permute.xlu0 %451
      %453 = vset.pattern.permute.xlu0 0
      %454 = vperm.xlu0 %453, %v253
      %v455 = vpop.permute.xlu0 %454
      %456 = vset.pattern.permute.xlu0 0
      %457 = vperm.xlu0 %456, %v254
      %v458 = vpop.permute.xlu0 %457
      %459 = vset.pattern.permute.xlu0 0
      %460 = vperm.xlu0 %459, %v255
      %v461 = vpop.permute.xlu0 %460
      %462 = vset.pattern.permute.xlu0 0
      %463 = vperm.xlu0 %462, %v256
      %v464 = vpop.permute.xlu0 %463
      %465 = vset.pattern.permute.xlu0 0
      %466 = vperm.xlu0 %465, %v257
      %v467 = vpop.permute.xlu0 %466
      %468 = vset.pattern.permute.xlu0 0
      %469 = vperm.xlu0 %468, %v258
      %v470 = vpop.permute.xlu0 %469
      %471 = vset.pattern.permute.xlu0 0
      %472 = vperm.xlu0 %471, %v259
      %v473 = vpop.permute.xlu0 %472
      %474 = vset.pattern.permute.xlu0 0
      %475 = vperm.xlu0 %474, %v260
      %v476 = vpop.permute.xlu0 %475
      %477 = vset.pattern.permute.xlu0 0
      %478 = vperm.xlu0 %477, %v261
      %v479 = vpop.permute.xlu0 %478
      %480 = vset.pattern.permute.xlu0 0
      %481 = vperm.xlu0 %480, %v262
      %v482 = vpop.permute.xlu0 %481
      %483 = vset.pattern.permute.xlu0 0
      %484 = vperm.xlu0 %483, %v263
      %v485 = vpop.permute.xlu0 %484
      %v486 = vlaneseq
      %v487 = vshrl.u32 %v486, 7
      %v488 = vsub.s32 0, %v487
      %v489 = vrot.slane %v247, %v488
      %vm490 = vcmp.eq.s32.totalorder %v440, %v489
      %vm491 = vcmp.eq.s32.totalorder %v443, %v489
      %vm492 = vcmp.eq.s32.totalorder %v446, %v489
      %vm493 = vcmp.eq.s32.totalorder %v449, %v489
      %vm494 = vcmp.eq.s32.totalorder %v452, %v489
      %vm495 = vcmp.eq.s32.totalorder %v455, %v489
      %vm496 = vcmp.eq.s32.totalorder %v458, %v489
      %vm497 = vcmp.eq.s32.totalorder %v461, %v489
      %vm498 = vcmp.eq.s32.totalorder %v464, %v489
      %vm499 = vcmp.eq.s32.totalorder %v467, %v489
      %vm500 = vcmp.eq.s32.totalorder %v470, %v489
      %vm501 = vcmp.eq.s32.totalorder %v473, %v489
      %vm502 = vcmp.eq.s32.totalorder %v476, %v489
      %vm503 = vcmp.eq.s32.totalorder %v479, %v489
      %vm504 = vcmp.eq.s32.totalorder %v482, %v489
      %vm505 = vcmp.eq.s32.totalorder %v485, %v489
      %vm506 = vmand %vm490, %vm422
      %vm507 = vmand %vm491, %vm423
      %vm508 = vmand %vm492, %vm424
      %vm509 = vmand %vm493, %vm425
      %vm510 = vmand %vm494, %vm426
      %vm511 = vmand %vm495, %vm427
      %vm512 = vmand %vm496, %vm428
      %vm513 = vmand %vm497, %vm429
      %vm514 = vmand %vm498, %vm430
      %vm515 = vmand %vm499, %vm431
      %vm516 = vmand %vm500, %vm432
      %vm517 = vmand %vm501, %vm433
      %vm518 = vmand %vm502, %vm434
      %vm519 = vmand %vm503, %vm435
      %vm520 = vmand %vm504, %vm436
      %vm521 = vmand %vm505, %vm437
      %v522 = vld [vmem:[#allocation4] sm:$0x1]
      %v523 = vsel %vm506, %v169, 0.0
      %v524 = vsel %vm507, %v174, 0.0
      %v525 = vsel %vm508, %v179, 0.0
      %v526 = vsel %vm509, %v184, 0.0
      %v527 = vsel %vm510, %v189, 0.0
      %v528 = vsel %vm511, %v194, 0.0
      %v529 = vsel %vm512, %v199, 0.0
      %v530 = vsel %vm513, %v204, 0.0
      %v531 = vsel %vm514, %v209, 0.0
      %v532 = vsel %vm515, %v214, 0.0
      %v533 = vsel %vm516, %v219, 0.0
      %v534 = vsel %vm517, %v224, 0.0
      %v535 = vsel %vm518, %v229, 0.0
      %v536 = vsel %vm519, %v234, 0.0
      %v537 = vsel %vm520, %v239, 0.0
      %v538 = vsel %vm521, %v244, 0.0
      %v539 = vadd.f32 %v523, %v524
      %v540 = vadd.f32 %v539, %v525
      %v541 = vadd.f32 %v540, %v526
      %v542 = vadd.f32 %v541, %v527
      %v543 = vadd.f32 %v542, %v528
      %v544 = vadd.f32 %v543, %v529
      %v545 = vadd.f32 %v544, %v530
      %v546 = vadd.f32 %v545, %v531
      %v547 = vadd.f32 %v546, %v532
      %v548 = vadd.f32 %v547, %v533
      %v549 = vadd.f32 %v548, %v534
      %v550 = vadd.f32 %v549, %v535
      %v551 = vadd.f32 %v550, %v536
      %v552 = vadd.f32 %v551, %v537
      %v553 = vadd.f32 %v552, %v538
      %v554 = vrot.slane %v553, 4
      %v555 = vadd.f32 %v553, %v554
      %v556 = vrot.slane %v555, 2
      %v557 = vadd.f32 %v555, %v556
      %v558 = vrot.slane %v557, 1
      %v559 = vadd.f32 %v557, %v558
      %v560 = vadd.f32 %v522, %v559
      %561 = vst [vmem:[#allocation4] sm:$0x1] %v560
      %v562 = vld [vmem:[#allocation5] sm:$0x1]
      %v563 = vsel %vm506, 1, 0
      %v564 = vsel %vm507, 1, 0
      %v565 = vsel %vm508, 1, 0
      %v566 = vsel %vm509, 1, 0
      %v567 = vsel %vm510, 1, 0
      %v568 = vsel %vm511, 1, 0
      %v569 = vsel %vm512, 1, 0
      %v570 = vsel %vm513, 1, 0
      %v571 = vsel %vm514, 1, 0
      %v572 = vsel %vm515, 1, 0
      %v573 = vsel %vm516, 1, 0
      %v574 = vsel %vm517, 1, 0
      %v575 = vsel %vm518, 1, 0
      %v576 = vsel %vm519, 1, 0
      %v577 = vsel %vm520, 1, 0
      %v578 = vsel %vm521, 1, 0
      %v579 = vcvt.s32.f32 %v563
      %v580 = vcvt.s32.f32 %v564
      %v581 = vcvt.s32.f32 %v565
      %v582 = vcvt.s32.f32 %v566
      %v583 = vcvt.s32.f32 %v567
      %v584 = vcvt.s32.f32 %v568
      %v585 = vcvt.s32.f32 %v569
      %v586 = vcvt.s32.f32 %v570
      %v587 = vcvt.s32.f32 %v571
      %v588 = vcvt.s32.f32 %v572
      %v589 = vcvt.s32.f32 %v573
      %v590 = vcvt.s32.f32 %v574
      %v591 = vcvt.s32.f32 %v575
      %v592 = vcvt.s32.f32 %v576
      %v593 = vcvt.s32.f32 %v577
      %v594 = vcvt.s32.f32 %v578
      %v595 = vadd.f32 %v579, %v580
      %v596 = vadd.f32 %v595, %v581
      %v597 = vadd.f32 %v596, %v582
      %v598 = vadd.f32 %v597, %v583
      %v599 = vadd.f32 %v598, %v584
      %v600 = vadd.f32 %v599, %v585
      %v601 = vadd.f32 %v600, %v586
      %v602 = vadd.f32 %v601, %v587
      %v603 = vadd.f32 %v602, %v588
      %v604 = vadd.f32 %v603, %v589
      %v605 = vadd.f32 %v604, %v590
      %v606 = vadd.f32 %v605, %v591
      %v607 = vadd.f32 %v606, %v592
      %v608 = vadd.f32 %v607, %v593
      %v609 = vadd.f32 %v608, %v594
      %v610 = vrot.slane %v609, 4
      %v611 = vadd.f32 %v609, %v610
      %v612 = vrot.slane %v611, 2
      %v613 = vadd.f32 %v611, %v612
      %v614 = vrot.slane %v613, 1
      %v615 = vadd.f32 %v613, %v614
      %v616 = vadd.f32 %v562, %v615
      %617 = vst [vmem:[#allocation5] sm:$0x1] %v616
      %v618 = vld [vmem:[#allocation2] sm:$0x1]
      %v619 = vmax.f32 %v169, %v189
      %v620 = vmax.f32 %v174, %v194
      %v621 = vmax.f32 %v179, %v199
      %v622 = vmax.f32 %v184, %v204
      %v623 = vmax.f32 %v619, %v209
      %v624 = vmax.f32 %v620, %v214
      %v625 = vmax.f32 %v621, %v219
      %v626 = vmax.f32 %v622, %v224
      %v627 = vmax.f32 %v623, %v229
      %v628 = vmax.f32 %v624, %v234
      %v629 = vmax.f32 %v625, %v239
      %v630 = vmax.f32 %v626, %v244
      %v631 = vmax.f32 %v627, %v628
      %v632 = vmax.f32 %v629, %v630
      %v633 = vmax.f32 %v631, %v632
      %v634 = vrot.slane %v633, 4
      %v635 = vmax.f32 %v633, %v634
      %v636 = vrot.slane %v635, 2
      %v637 = vmax.f32 %v635, %v636
      %v638 = vrot.slane %v637, 1
      %v639 = vmax.f32 %v637, %v638
      %v640 = vmax.f32 %v618, %v639
      %v642 = vlaneseq
      %v643 = vshrl.u32 %v642, 7
      %v644 = vsub.s32 0, %v643
      %v645 = vrot.slane %v640, %v644
      %v647 = vsub.f32 %v169, %v645
      %v648 = vsub.f32 %v174, %v645
      %v649 = vsub.f32 %v179, %v645
      %v650 = vsub.f32 %v184, %v645
      %v651 = vsub.f32 %v189, %v645
      %v652 = vsub.f32 %v194, %v645
      %v653 = vsub.f32 %v199, %v645
      %v654 = vsub.f32 %v204, %v645
      %v655 = vsub.f32 %v209, %v645
      %v656 = vsub.f32 %v214, %v645
      %v657 = vsub.f32 %v219, %v645
      %v658 = vsub.f32 %v224, %v645
      %v659 = vsub.f32 %v229, %v645
      %v660 = vsub.f32 %v234, %v645
      %v661 = vsub.f32 %v239, %v645
      %v662 = vsub.f32 %v244, %v645
      %v663 = vmul.f32 %v647, 1.442695
      %v664 = vpow.pop %v663
      %v665 = vmul.f32 %v648, 1.442695
      %v666 = vpow.pop %v665
      %v667 = vmul.f32 %v649, 1.442695
      %v668 = vpow.pop %v667
      %v669 = vmul.f32 %v650, 1.442695
      %v670 = vpow.pop %v669
      %v671 = vmul.f32 %v651, 1.442695
      %v672 = vpow.pop %v671
      %v673 = vmul.f32 %v652, 1.442695
      %v674 = vpow.pop %v673
      %v675 = vmul.f32 %v653, 1.442695
      %v676 = vpow.pop %v675
      %v677 = vmul.f32 %v654, 1.442695
      %v678 = vpow.pop %v677
      %v679 = vmul.f32 %v655, 1.442695
      %v680 = vpow.pop %v679
      %v681 = vmul.f32 %v656, 1.442695
      %v682 = vpow.pop %v681
      %v683 = vmul.f32 %v657, 1.442695
      %v684 = vpow.pop %v683
      %v685 = vmul.f32 %v658, 1.442695
      %v686 = vpow.pop %v685
      %v687 = vmul.f32 %v659, 1.442695
      %v688 = vpow.pop %v687
      %v689 = vmul.f32 %v660, 1.442695
      %v690 = vpow.pop %v689
      %v691 = vmul.f32 %v661, 1.442695
      %v692 = vpow.pop %v691
      %v693 = vmul.f32 %v662, 1.442695
      %v694 = vpow.pop %v693
      %v695 = vsel %vm422, %v664, 0.0
      %v696 = vsel %vm423, %v666, 0.0
      %v697 = vsel %vm424, %v668, 0.0
      %v698 = vsel %vm425, %v670, 0.0
      %v699 = vsel %vm426, %v672, 0.0
      %v700 = vsel %vm427, %v674, 0.0
      %v701 = vsel %vm428, %v676, 0.0
      %v702 = vsel %vm429, %v678, 0.0
      %v703 = vsel %vm430, %v680, 0.0
      %v704 = vsel %vm431, %v682, 0.0
      %v705 = vsel %vm432, %v684, 0.0
      %v706 = vsel %vm433, %v686, 0.0
      %v707 = vsel %vm434, %v688, 0.0
      %v708 = vsel %vm435, %v690, 0.0
      %v709 = vsel %vm436, %v692, 0.0
      %v710 = vsel %vm437, %v694, 0.0
      %v711 = vsub.f32 %v618, %v640
      %v712 = vmul.f32 %v711, 1.442695
      %v713 = vpow.pop %v712
      %v714 = vld [vmem:[#allocation3] sm:$0x1]
      %v715 = vmul.f32 %v713, %v714
      %v716 = vadd.f32 %v695, %v696
      %v717 = vadd.f32 %v716, %v697
      %v718 = vadd.f32 %v717, %v698
      %v719 = vadd.f32 %v718, %v699
      %v720 = vadd.f32 %v719, %v700
      %v721 = vadd.f32 %v720, %v701
      %v722 = vadd.f32 %v721, %v702
      %v723 = vadd.f32 %v722, %v703
      %v724 = vadd.f32 %v723, %v704
      %v725 = vadd.f32 %v724, %v705
      %v726 = vadd.f32 %v725, %v706
      %v727 = vadd.f32 %v726, %v707
      %v728 = vadd.f32 %v727, %v708
      %v729 = vadd.f32 %v728, %v709
      %v730 = vadd.f32 %v729, %v710
      %v731 = vrot.slane %v730, 4
      %v732 = vadd.f32 %v730, %v731
      %v733 = vrot.slane %v732, 2
      %v734 = vadd.f32 %v732, %v733
      %v735 = vrot.slane %v734, 1
      %v736 = vadd.f32 %v734, %v735
      %v737 = vadd.f32 %v715, %v736
      %738 = vst [vmem:[#allocation3] sm:$0x1] %v737
      %739 = vst [vmem:[#allocation2] sm:$0x1] %v640
    $region21: #{tpu_custom_call.1} parent=1 // pred_fallthru
      _
    %p740 = pneg %p285
    // Predicated region
    $region22: #{tpu_custom_call.1} parent=1 // pred_check
      _
    $region23: #{tpu_custom_call.1} parent=1 // pred_check_branch
      %742 = sbr.rel (%p285) target = $region25
    $region24: #{tpu_custom_call.1} parent=1 // pred_region
      %743 = vset.pattern.permute.xlu0 0
      %744 = vperm.xlu0 %743, %v248
      %v745 = vpop.permute.xlu0 %744
      %746 = vset.pattern.permute.xlu0 0
      %747 = vperm.xlu0 %746, %v249
      %v748 = vpop.permute.xlu0 %747
      %749 = vset.pattern.permute.xlu0 0
      %750 = vperm.xlu0 %749, %v250
      %v751 = vpop.permute.xlu0 %750
      %752 = vset.pattern.permute.xlu0 0
      %753 = vperm.xlu0 %752, %v251
      %v754 = vpop.permute.xlu0 %753
      %755 = vset.pattern.permute.xlu0 0
      %756 = vperm.xlu0 %755, %v252
      %v757 = vpop.permute.xlu0 %756
      %758 = vset.pattern.permute.xlu0 0
      %759 = vperm.xlu0 %758, %v253
      %v760 = vpop.permute.xlu0 %759
      %761 = vset.pattern.permute.xlu0 0
      %762 = vperm.xlu0 %761, %v254
      %v763 = vpop.permute.xlu0 %762
      %764 = vset.pattern.permute.xlu0 0
      %765 = vperm.xlu0 %764, %v255
      %v766 = vpop.permute.xlu0 %765
      %767 = vset.pattern.permute.xlu0 0
      %768 = vperm.xlu0 %767, %v256
      %v769 = vpop.permute.xlu0 %768
      %770 = vset.pattern.permute.xlu0 0
      %771 = vperm.xlu0 %770, %v257
      %v772 = vpop.permute.xlu0 %771
      %773 = vset.pattern.permute.xlu0 0
      %774 = vperm.xlu0 %773, %v258
      %v775 = vpop.permute.xlu0 %774
      %776 = vset.pattern.permute.xlu0 0
      %777 = vperm.xlu0 %776, %v259
      %v778 = vpop.permute.xlu0 %777
      %779 = vset.pattern.permute.xlu0 0
      %780 = vperm.xlu0 %779, %v260
      %v781 = vpop.permute.xlu0 %780
      %782 = vset.pattern.permute.xlu0 0
      %783 = vperm.xlu0 %782, %v261
      %v784 = vpop.permute.xlu0 %783
      %785 = vset.pattern.permute.xlu0 0
      %786 = vperm.xlu0 %785, %v262
      %v787 = vpop.permute.xlu0 %786
      %788 = vset.pattern.permute.xlu0 0
      %789 = vperm.xlu0 %788, %v263
      %v790 = vpop.permute.xlu0 %789
      %v791 = vlaneseq
      %v792 = vshrl.u32 %v791, 7
      %v793 = vsub.s32 0, %v792
      %v794 = vrot.slane %v247, %v793
      %vm795 = vcmp.eq.s32.totalorder %v745, %v794
      %vm796 = vcmp.eq.s32.totalorder %v748, %v794
      %vm797 = vcmp.eq.s32.totalorder %v751, %v794
      %vm798 = vcmp.eq.s32.totalorder %v754, %v794
      %vm799 = vcmp.eq.s32.totalorder %v757, %v794
      %vm800 = vcmp.eq.s32.totalorder %v760, %v794
      %vm801 = vcmp.eq.s32.totalorder %v763, %v794
      %vm802 = vcmp.eq.s32.totalorder %v766, %v794
      %vm803 = vcmp.eq.s32.totalorder %v769, %v794
      %vm804 = vcmp.eq.s32.totalorder %v772, %v794
      %vm805 = vcmp.eq.s32.totalorder %v775, %v794
      %vm806 = vcmp.eq.s32.totalorder %v778, %v794
      %vm807 = vcmp.eq.s32.totalorder %v781, %v794
      %vm808 = vcmp.eq.s32.totalorder %v784, %v794
      %vm809 = vcmp.eq.s32.totalorder %v787, %v794
      %vm810 = vcmp.eq.s32.totalorder %v790, %v794
      %v811 = vsel %vm264, 1, 0
      %v812 = vsel %vm265, 1, 0
      %v813 = vsel %vm266, 1, 0
      %v814 = vsel %vm267, 1, 0
      %v815 = vsel %vm268, 1, 0
      %v816 = vsel %vm269, 1, 0
      %v817 = vsel %vm270, 1, 0
      %v818 = vsel %vm271, 1, 0
      %v819 = vsel %vm272, 1, 0
      %v820 = vsel %vm273, 1, 0
      %v821 = vsel %vm274, 1, 0
      %v822 = vsel %vm275, 1, 0
      %v823 = vsel %vm276, 1, 0
      %v824 = vsel %vm277, 1, 0
      %v825 = vsel %vm278, 1, 0
      %v826 = vsel %vm279, 1, 0
      %827 = vset.pattern.permute.xlu0 0
      %828 = vperm.xlu0 %827, %v811
      %v829 = vpop.permute.xlu0 %828
      %830 = vset.pattern.permute.xlu0 0
      %831 = vperm.xlu0 %830, %v812
      %v832 = vpop.permute.xlu0 %831
      %833 = vset.pattern.permute.xlu0 0
      %834 = vperm.xlu0 %833, %v813
      %v835 = vpop.permute.xlu0 %834
      %836 = vset.pattern.permute.xlu0 0
      %837 = vperm.xlu0 %836, %v814
      %v838 = vpop.permute.xlu0 %837
      %839 = vset.pattern.permute.xlu0 0
      %840 = vperm.xlu0 %839, %v815
      %v841 = vpop.permute.xlu0 %840
      %842 = vset.pattern.permute.xlu0 0
      %843 = vperm.xlu0 %842, %v816
      %v844 = vpop.permute.xlu0 %843
      %845 = vset.pattern.permute.xlu0 0
      %846 = vperm.xlu0 %845, %v817
      %v847 = vpop.permute.xlu0 %846
      %848 = vset.pattern.permute.xlu0 0
      %849 = vperm.xlu0 %848, %v818
      %v850 = vpop.permute.xlu0 %849
      %851 = vset.pattern.permute.xlu0 0
      %852 = vperm.xlu0 %851, %v819
      %v853 = vpop.permute.xlu0 %852
      %854 = vset.pattern.permute.xlu0 0
      %855 = vperm.xlu0 %854, %v820
      %v856 = vpop.permute.xlu0 %855
      %857 = vset.pattern.permute.xlu0 0
      %858 = vperm.xlu0 %857, %v821
      %v859 = vpop.permute.xlu0 %858
      %860 = vset.pattern.permute.xlu0 0
      %861 = vperm.xlu0 %860, %v822
      %v862 = vpop.permute.xlu0 %861
      %863 = vset.pattern.permute.xlu0 0
      %864 = vperm.xlu0 %863, %v823
      %v865 = vpop.permute.xlu0 %864
      %866 = vset.pattern.permute.xlu0 0
      %867 = vperm.xlu0 %866, %v824
      %v868 = vpop.permute.xlu0 %867
      %869 = vset.pattern.permute.xlu0 0
      %870 = vperm.xlu0 %869, %v825
      %v871 = vpop.permute.xlu0 %870
      %872 = vset.pattern.permute.xlu0 0
      %873 = vperm.xlu0 %872, %v826
      %v874 = vpop.permute.xlu0 %873
      %vm875 = vcmp.eq.s32.totalorder %v829, 1
      %vm876 = vcmp.eq.s32.totalorder %v832, 1
      %vm877 = vcmp.eq.s32.totalorder %v835, 1
      %vm878 = vcmp.eq.s32.totalorder %v838, 1
      %vm879 = vcmp.eq.s32.totalorder %v841, 1
      %vm880 = vcmp.eq.s32.totalorder %v844, 1
      %vm881 = vcmp.eq.s32.totalorder %v847, 1
      %vm882 = vcmp.eq.s32.totalorder %v850, 1
      %vm883 = vcmp.eq.s32.totalorder %v853, 1
      %vm884 = vcmp.eq.s32.totalorder %v856, 1
      %vm885 = vcmp.eq.s32.totalorder %v859, 1
      %vm886 = vcmp.eq.s32.totalorder %v862, 1
      %vm887 = vcmp.eq.s32.totalorder %v865, 1
      %vm888 = vcmp.eq.s32.totalorder %v868, 1
      %vm889 = vcmp.eq.s32.totalorder %v871, 1
      %vm890 = vcmp.eq.s32.totalorder %v874, 1
      %vm891 = vmand %vm795, %vm875
      %vm892 = vmand %vm796, %vm876
      %vm893 = vmand %vm797, %vm877
      %vm894 = vmand %vm798, %vm878
      %vm895 = vmand %vm799, %vm879
      %vm896 = vmand %vm800, %vm880
      %vm897 = vmand %vm801, %vm881
      %vm898 = vmand %vm802, %vm882
      %vm899 = vmand %vm803, %vm883
      %vm900 = vmand %vm804, %vm884
      %vm901 = vmand %vm805, %vm885
      %vm902 = vmand %vm806, %vm886
      %vm903 = vmand %vm807, %vm887
      %vm904 = vmand %vm808, %vm888
      %vm905 = vmand %vm809, %vm889
      %vm906 = vmand %vm810, %vm890
      %v907 = vld [vmem:[#allocation4] sm:$0x1]
      %v908 = vsel %vm891, %v169, 0.0
      %v909 = vsel %vm892, %v174, 0.0
      %v910 = vsel %vm893, %v179, 0.0
      %v911 = vsel %vm894, %v184, 0.0
      %v912 = vsel %vm895, %v189, 0.0
      %v913 = vsel %vm896, %v194, 0.0
      %v914 = vsel %vm897, %v199, 0.0
      %v915 = vsel %vm898, %v204, 0.0
      %v916 = vsel %vm899, %v209, 0.0
      %v917 = vsel %vm900, %v214, 0.0
      %v918 = vsel %vm901, %v219, 0.0
      %v919 = vsel %vm902, %v224, 0.0
      %v920 = vsel %vm903, %v229, 0.0
      %v921 = vsel %vm904, %v234, 0.0
      %v922 = vsel %vm905, %v239, 0.0
      %v923 = vsel %vm906, %v244, 0.0
      %v924 = vadd.f32 %v908, %v909
      %v925 = vadd.f32 %v924, %v910
      %v926 = vadd.f32 %v925, %v911
      %v927 = vadd.f32 %v926, %v912
      %v928 = vadd.f32 %v927, %v913
      %v929 = vadd.f32 %v928, %v914
      %v930 = vadd.f32 %v929, %v915
      %v931 = vadd.f32 %v930, %v916
      %v932 = vadd.f32 %v931, %v917
      %v933 = vadd.f32 %v932, %v918
      %v934 = vadd.f32 %v933, %v919
      %v935 = vadd.f32 %v934, %v920
      %v936 = vadd.f32 %v935, %v921
      %v937 = vadd.f32 %v936, %v922
      %v938 = vadd.f32 %v937, %v923
      %v939 = vrot.slane %v938, 4
      %v940 = vadd.f32 %v938, %v939
      %v941 = vrot.slane %v940, 2
      %v942 = vadd.f32 %v940, %v941
      %v943 = vrot.slane %v942, 1
      %v944 = vadd.f32 %v942, %v943
      %v945 = vadd.f32 %v907, %v944
      %946 = vst [vmem:[#allocation4] sm:$0x1] %v945
      %v947 = vld [vmem:[#allocation5] sm:$0x1]
      %v948 = vsel %vm891, 1, 0
      %v949 = vsel %vm892, 1, 0
      %v950 = vsel %vm893, 1, 0
      %v951 = vsel %vm894, 1, 0
      %v952 = vsel %vm895, 1, 0
      %v953 = vsel %vm896, 1, 0
      %v954 = vsel %vm897, 1, 0
      %v955 = vsel %vm898, 1, 0
      %v956 = vsel %vm899, 1, 0
      %v957 = vsel %vm900, 1, 0
      %v958 = vsel %vm901, 1, 0
      %v959 = vsel %vm902, 1, 0
      %v960 = vsel %vm903, 1, 0
      %v961 = vsel %vm904, 1, 0
      %v962 = vsel %vm905, 1, 0
      %v963 = vsel %vm906, 1, 0
      %v964 = vcvt.s32.f32 %v948
      %v965 = vcvt.s32.f32 %v949
      %v966 = vcvt.s32.f32 %v950
      %v967 = vcvt.s32.f32 %v951
      %v968 = vcvt.s32.f32 %v952
      %v969 = vcvt.s32.f32 %v953
      %v970 = vcvt.s32.f32 %v954
      %v971 = vcvt.s32.f32 %v955
      %v972 = vcvt.s32.f32 %v956
      %v973 = vcvt.s32.f32 %v957
      %v974 = vcvt.s32.f32 %v958
      %v975 = vcvt.s32.f32 %v959
      %v976 = vcvt.s32.f32 %v960
      %v977 = vcvt.s32.f32 %v961
      %v978 = vcvt.s32.f32 %v962
      %v979 = vcvt.s32.f32 %v963
      %v980 = vadd.f32 %v964, %v965
      %v981 = vadd.f32 %v980, %v966
      %v982 = vadd.f32 %v981, %v967
      %v983 = vadd.f32 %v982, %v968
      %v984 = vadd.f32 %v983, %v969
      %v985 = vadd.f32 %v984, %v970
      %v986 = vadd.f32 %v985, %v971
      %v987 = vadd.f32 %v986, %v972
      %v988 = vadd.f32 %v987, %v973
      %v989 = vadd.f32 %v988, %v974
      %v990 = vadd.f32 %v989, %v975
      %v991 = vadd.f32 %v990, %v976
      %v992 = vadd.f32 %v991, %v977
      %v993 = vadd.f32 %v992, %v978
      %v994 = vadd.f32 %v993, %v979
      %v995 = vrot.slane %v994, 4
      %v996 = vadd.f32 %v994, %v995
      %v997 = vrot.slane %v996, 2
      %v998 = vadd.f32 %v996, %v997
      %v999 = vrot.slane %v998, 1
      %v1000 = vadd.f32 %v998, %v999
      %v1001 = vadd.f32 %v947, %v1000
      %1002 = vst [vmem:[#allocation5] sm:$0x1] %v1001
      %v1003 = vld [vmem:[#allocation2] sm:$0x1]
      %v1004 = vmax.f32 %v169, %v189
      %v1005 = vmax.f32 %v174, %v194
      %v1006 = vmax.f32 %v179, %v199
      %v1007 = vmax.f32 %v184, %v204
      %v1008 = vmax.f32 %v1004, %v209
      %v1009 = vmax.f32 %v1005, %v214
      %v1010 = vmax.f32 %v1006, %v219
      %v1011 = vmax.f32 %v1007, %v224
      %v1012 = vmax.f32 %v1008, %v229
      %v1013 = vmax.f32 %v1009, %v234
      %v1014 = vmax.f32 %v1010, %v239
      %v1015 = vmax.f32 %v1011, %v244
      %v1016 = vmax.f32 %v1012, %v1013
      %v1017 = vmax.f32 %v1014, %v1015
      %v1018 = vmax.f32 %v1016, %v1017
      %v1019 = vrot.slane %v1018, 4
      %v1020 = vmax.f32 %v1018, %v1019
      %v1021 = vrot.slane %v1020, 2
      %v1022 = vmax.f32 %v1020, %v1021
      %v1023 = vrot.slane %v1022, 1
      %v1024 = vmax.f32 %v1022, %v1023
      %v1025 = vmax.f32 %v1003, %v1024
      %v1027 = vlaneseq
      %v1028 = vshrl.u32 %v1027, 7
      %v1029 = vsub.s32 0, %v1028
      %v1030 = vrot.slane %v1025, %v1029
      %v1032 = vsub.f32 %v169, %v1030
      %v1033 = vsub.f32 %v174, %v1030
      %v1034 = vsub.f32 %v179, %v1030
      %v1035 = vsub.f32 %v184, %v1030
      %v1036 = vsub.f32 %v189, %v1030
      %v1037 = vsub.f32 %v194, %v1030
      %v1038 = vsub.f32 %v199, %v1030
      %v1039 = vsub.f32 %v204, %v1030
      %v1040 = vsub.f32 %v209, %v1030
      %v1041 = vsub.f32 %v214, %v1030
      %v1042 = vsub.f32 %v219, %v1030
      %v1043 = vsub.f32 %v224, %v1030
      %v1044 = vsub.f32 %v229, %v1030
      %v1045 = vsub.f32 %v234, %v1030
      %v1046 = vsub.f32 %v239, %v1030
      %v1047 = vsub.f32 %v244, %v1030
      %v1048 = vmul.f32 %v1032, 1.442695
      %v1049 = vpow.pop %v1048
      %v1050 = vmul.f32 %v1033, 1.442695
      %v1051 = vpow.pop %v1050
      %v1052 = vmul.f32 %v1034, 1.442695
      %v1053 = vpow.pop %v1052
      %v1054 = vmul.f32 %v1035, 1.442695
      %v1055 = vpow.pop %v1054
      %v1056 = vmul.f32 %v1036, 1.442695
      %v1057 = vpow.pop %v1056
      %v1058 = vmul.f32 %v1037, 1.442695
      %v1059 = vpow.pop %v1058
      %v1060 = vmul.f32 %v1038, 1.442695
      %v1061 = vpow.pop %v1060
      %v1062 = vmul.f32 %v1039, 1.442695
      %v1063 = vpow.pop %v1062
      %v1064 = vmul.f32 %v1040, 1.442695
      %v1065 = vpow.pop %v1064
      %v1066 = vmul.f32 %v1041, 1.442695
      %v1067 = vpow.pop %v1066
      %v1068 = vmul.f32 %v1042, 1.442695
      %v1069 = vpow.pop %v1068
      %v1070 = vmul.f32 %v1043, 1.442695
      %v1071 = vpow.pop %v1070
      %v1072 = vmul.f32 %v1044, 1.442695
      %v1073 = vpow.pop %v1072
      %v1074 = vmul.f32 %v1045, 1.442695
      %v1075 = vpow.pop %v1074
      %v1076 = vmul.f32 %v1046, 1.442695
      %v1077 = vpow.pop %v1076
      %v1078 = vmul.f32 %v1047, 1.442695
      %v1079 = vpow.pop %v1078
      %v1080 = vsel %vm875, %v1049, 0.0
      %v1081 = vsel %vm876, %v1051, 0.0
      %v1082 = vsel %vm877, %v1053, 0.0
      %v1083 = vsel %vm878, %v1055, 0.0
      %v1084 = vsel %vm879, %v1057, 0.0
      %v1085 = vsel %vm880, %v1059, 0.0
      %v1086 = vsel %vm881, %v1061, 0.0
      %v1087 = vsel %vm882, %v1063, 0.0
      %v1088 = vsel %vm883, %v1065, 0.0
      %v1089 = vsel %vm884, %v1067, 0.0
      %v1090 = vsel %vm885, %v1069, 0.0
      %v1091 = vsel %vm886, %v1071, 0.0
      %v1092 = vsel %vm887, %v1073, 0.0
      %v1093 = vsel %vm888, %v1075, 0.0
      %v1094 = vsel %vm889, %v1077, 0.0
      %v1095 = vsel %vm890, %v1079, 0.0
      %v1096 = vsub.f32 %v1003, %v1025
      %v1097 = vmul.f32 %v1096, 1.442695
      %v1098 = vpow.pop %v1097
      %v1099 = vld [vmem:[#allocation3] sm:$0x1]
      %v1100 = vmul.f32 %v1098, %v1099
      %v1101 = vadd.f32 %v1080, %v1081
      %v1102 = vadd.f32 %v1101, %v1082
      %v1103 = vadd.f32 %v1102, %v1083
      %v1104 = vadd.f32 %v1103, %v1084
      %v1105 = vadd.f32 %v1104, %v1085
      %v1106 = vadd.f32 %v1105, %v1086
      %v1107 = vadd.f32 %v1106, %v1087
      %v1108 = vadd.f32 %v1107, %v1088
      %v1109 = vadd.f32 %v1108, %v1089
      %v1110 = vadd.f32 %v1109, %v1090
      %v1111 = vadd.f32 %v1110, %v1091
      %v1112 = vadd.f32 %v1111, %v1092
      %v1113 = vadd.f32 %v1112, %v1093
      %v1114 = vadd.f32 %v1113, %v1094
      %v1115 = vadd.f32 %v1114, %v1095
      %v1116 = vrot.slane %v1115, 4
      %v1117 = vadd.f32 %v1115, %v1116
      %v1118 = vrot.slane %v1117, 2
      %v1119 = vadd.f32 %v1117, %v1118
      %v1120 = vrot.slane %v1119, 1
      %v1121 = vadd.f32 %v1119, %v1120
      %v1122 = vadd.f32 %v1100, %v1121
      %1123 = vst [vmem:[#allocation3] sm:$0x1] %v1122
      %1124 = vst [vmem:[#allocation2] sm:$0x1] %v1025
    $region25: #{tpu_custom_call.1} parent=1 // pred_fallthru
      _
    // Predicated region
    $region26: #{tpu_custom_call.1} parent=1 // pred_check
      %p1125 = pneg %p17
    $region27: #{tpu_custom_call.1} parent=1 // pred_check_branch
      %1127 = sbr.rel (%p1125) target = $region29
    $region28: #{tpu_custom_call.1} parent=1 // pred_region
      %v1128 = vld [vmem:[#allocation2] sm:$0x1]
      %v1129 = vld [vmem:[#allocation3] sm:$0x1]
      %v1130 = vlog2.pop %v1129
      %v1131 = vmul.f32 %v1130, 0.6931472
      %v1132 = vadd.f32 %v1128, %v1131
      %v1133 = vld [vmem:[#allocation4] sm:$0x1]
      %v1134 = vld [vmem:[#allocation5] sm:$0x1]
      %v1135 = vrcp.pop %v1134
      %v1136 = vmul.f32 %v1133, %v1135
      %v1137 = vsub.f32 %v1136, %v1132
      %vm1138 = vcmp.ge.s32.totalorder %v247, 0
      %v1139 = vmul.f32 %v1137, -0.0625
      %v1140 = vsel %vm1138, %v1139, 0.0
      %1141 = vst [vmem:[#allocation7] sm:$0x1] %v1140
    $region29: #{tpu_custom_call.1} parent=1 // pred_fallthru
      _
    // Predicated region
    $region30: #{tpu_custom_call.1} parent=1 // pred_check
      _
    $region31: #{tpu_custom_call.1} parent=1 // pred_check_branch
      %1143 = sbr.rel (0) target = $region33
    $region32: #{tpu_custom_call.1} parent=1 // pred_region
      %s1145 = ssub.s32 16, 16
      %1146 = vsyncadd [#allocation8], %s1145
      %s1148 = sshll.u32 [#allocation7], 4
      %s1149 = int_to_ptr.vmem [resolvable:$true] %s1148
      %1151 = dma.vmem_to_hbm [thread:$0]  %s1149, 16, %s3, [#allocation8]
    $region33: #{tpu_custom_call.1} parent=1 // pred_fallthru
      _
    // Predicated region
    $region34: #{tpu_custom_call.1} parent=1 // pred_check
      _
    $region35: #{tpu_custom_call.1} parent=1 // pred_check_branch
      %1153 = sbr.rel (0) target = $region37
    $region36: #{tpu_custom_call.1} parent=1 // pred_region
      %1154 = dma.done [#allocation8], 16
    $region37: #{tpu_custom_call.1} parent=1 // pred_fallthru
      _
    %1155 = vsyncpa [#allocation8], 1

</llo_original>
